<compile_context>
chip_gen: v5e
topology: v5e:2x2
jax: 0.10.0
libtpu: 0.0.40
codegen_flags: <defaults>
</compile_context>

<pallas_src>
import functools

import jax
import jax.numpy as jnp
from jax.experimental import pallas as pl
from jax.experimental.pallas import tpu as pltpu


_MIB = 1024 * 1024
_TILE_TARGET_BYTES = 2 * _MIB     # ~2 MiB row tiles: ~90% of HBM roofline


# ---------------------------------------------------------------------------
# helpers
# ---------------------------------------------------------------------------
def _round_up(v, m):
    return ((v + m - 1) // m) * m


def _sublane_multiple(dtype):
    # f32 -> 8 rows per vreg, bf16 -> 16, int8/fp8 -> 32 (sublane packing).
    return max(8, 32 // jnp.dtype(dtype).itemsize)


def _vmem_capacity_bytes():
    try:
        return int(pltpu.get_tpu_info().vmem_capacity_bytes)
    except Exception:
        return 64 * _MIB          # conservative fallback (v7x); v5e/v6e have 128 MiB


# ---------------------------------------------------------------------------
# fused single-block kernels (input fits in VMEM; 1 read + 1 write of x)
# ---------------------------------------------------------------------------
def _pn_fused_kernel(x_ref, o_ref, *, scale):
    x = x_ref[...].astype(jnp.float32)
    xc = x - jnp.mean(x, axis=0, keepdims=True)
    # Sum (x - mu)^2 directly (no cancellation, xc already materialized).
    msq = jnp.sum(xc * xc, keepdims=True) * jnp.float32(1.0 / x.shape[0])     # [1,1]
    mult = jnp.float32(scale) * jax.lax.rsqrt(jnp.float32(1e-6) + msq)
    o_ref[...] = (xc * mult).astype(o_ref.dtype)


def _pn_si_fused_kernel(x_ref, o_ref, *, scale):
    x = x_ref[...].astype(jnp.float32)
    xc = x - jnp.mean(x, axis=0, keepdims=True)
    inv = jax.lax.rsqrt(jnp.float32(1e-6) + jnp.sum(xc * xc, axis=1, keepdims=True))
    o_ref[...] = (xc * (jnp.float32(scale) * inv)).astype(o_ref.dtype)


def _pn_scs_fused_kernel(x_ref, o_ref, *, scale):
    x = x_ref[...].astype(jnp.float32)
    cmean = jnp.mean(x, axis=0, keepdims=True)
    inv = jax.lax.rsqrt(jnp.float32(1e-6) + jnp.sum(x * x, axis=1, keepdims=True))
    o_ref[...] = (x * (jnp.float32(scale) * inv) - cmean).astype(o_ref.dtype)


_FUSED_KERNELS = {
    'PN': _pn_fused_kernel,
    'PN-SI': _pn_si_fused_kernel,
    'PN-SCS': _pn_scs_fused_kernel,
}


# ---------------------------------------------------------------------------
# tiled two-pass kernels
# ---------------------------------------------------------------------------
def _mean_stats_kernel(x_ref, cmean_ref, *, n_rows, tile_rows, ragged):
    """Pass 1 (PN-SI / PN-SCS): accumulate column sums, emit col_mean at the end."""
    i = pl.program_id(0)

    @pl.when(i == 0)
    def _():
        cmean_ref[...] = jnp.zeros_like(cmean_ref)

    x = x_ref[...].astype(jnp.float32)
    if ragged:  # mask the tail tile's out-of-range rows (Pallas pads with garbage)
        row = jax.lax.broadcasted_iota(jnp.int32, x.shape, 0) + i * tile_rows
        x = jnp.where(row < n_rows, x, jnp.float32(0.0))
    cmean_ref[...] += jnp.sum(x, axis=0, keepdims=True)

    @pl.when(i == pl.num_programs(0) - 1)
    def _():
        cmean_ref[...] *= jnp.float32(1.0 / n_rows)    # true N, not padded


def _pn_stats_kernel(x_ref, cmean_ref, mult_ref, sq_acc,
                     *, n_rows, tile_rows, scale, ragged):
    """Pass 1 (PN): column sums + sum-of-squares; emit col_mean and scalar mult."""
    i = pl.program_id(0)

    @pl.when(i == 0)
    def _():
        cmean_ref[...] = jnp.zeros_like(cmean_ref)
        sq_acc[...] = jnp.zeros_like(sq_acc)

    x = x_ref[...].astype(jnp.float32)
    if ragged:
        row = jax.lax.broadcasted_iota(jnp.int32, x.shape, 0) + i * tile_rows
        x = jnp.where(row < n_rows, x, jnp.float32(0.0))
    cmean_ref[...] += jnp.sum(x, axis=0, keepdims=True)
    sq_acc[...] += jnp.sum(x * x, axis=0, keepdims=True)

    @pl.when(i == pl.num_programs(0) - 1)
    def _():
        inv_n = jnp.float32(1.0 / n_rows)
        cmean = cmean_ref[...] * inv_n
        cmean_ref[...] = cmean
        # sum_i ||x_i - mu||^2 = sum_i ||x_i||^2 - N * ||mu||^2  (f32; subject to
        # cancellation only when |mu| >> per-row std -- clamped at 0 as a guard).
        tot_sq = (jnp.sum(sq_acc[...], keepdims=True)
                  - jnp.float32(n_rows) * jnp.sum(cmean * cmean, keepdims=True))
        tot_sq = jnp.maximum(tot_sq, jnp.float32(0.0))
        mult_ref[...] = (jnp.float32(scale)
                         * jax.lax.rsqrt(jnp.float32(1e-6) + tot_sq * inv_n))


def _pn_apply_kernel(cmean_ref, mult_ref, x_ref, o_ref):
    """Pass 2 'PN': o = (x - col_mean) * mult   (mult is a resident [1,1] block)."""
    x = x_ref[...].astype(jnp.float32)
    o_ref[...] = ((x - cmean_ref[...]) * mult_ref[...]).astype(o_ref.dtype)


def _pn_si_apply_kernel(cmean_ref, x_ref, o_ref, *, scale):
    """Pass 2 'PN-SI': per-row rsqrt normalization after centering."""
    x = x_ref[...].astype(jnp.float32)
    xc = x - cmean_ref[...]
    inv = jax.lax.rsqrt(jnp.float32(1e-6) + jnp.sum(xc * xc, axis=1, keepdims=True))
    o_ref[...] = (xc * (jnp.float32(scale) * inv)).astype(o_ref.dtype)


def _pn_scs_apply_kernel(cmean_ref, x_ref, o_ref, *, scale):
    """Pass 2 'PN-SCS': per-row rsqrt normalization, then subtract col mean."""
    x = x_ref[...].astype(jnp.float32)
    inv = jax.lax.rsqrt(jnp.float32(1e-6) + jnp.sum(x * x, axis=1, keepdims=True))
    o_ref[...] = (x * (jnp.float32(scale) * inv) - cmean_ref[...]).astype(o_ref.dtype)


# ---------------------------------------------------------------------------
# wrapper
# ---------------------------------------------------------------------------
def pair_norm(x, mode='PN', scale=1.0, *, _force_tiled=False, _tile_target_bytes=None):
    """Pallas TPU implementation of PairNorm.forward.  x: [N, D]."""
    assert mode in ['None', 'PN', 'PN-SI', 'PN-SCS']
    if mode == 'None':
        return x

    n, d = x.shape
    scale = float(scale)
    itemsize = jnp.dtype(x.dtype).itemsize
    sub = _sublane_multiple(x.dtype)
    cap = _vmem_capacity_bytes()

    # ---- fused single-block fast path --------------------------------------
    # Rough fused working set: in + out + a few f32 temporaries of x.
    fused_est = n * d * (2 * itemsize + 12)
    if (not _force_tiled) and fused_est <= cap // 3:
        kernel = functools.partial(_FUSED_KERNELS[mode], scale=scale)
        return pl.pallas_call(
            kernel,
            out_shape=jax.ShapeDtypeStruct((n, d), x.dtype),
            compiler_params=pltpu.CompilerParams(vmem_limit_bytes=int(cap // 2)),
        )(x)

    # ---- tiled two-pass path -------------------------------------------------
    target = int(_tile_target_bytes or _TILE_TARGET_BYTES)
    row_bytes = max(1, d * itemsize)
    tile_rows = max(sub, (target // row_bytes) // sub * sub)
    tile_rows = min(tile_rows, _round_up(n, sub))
    num_tiles = -(-n // tile_rows)
    tile_rows = _round_up(-(-n // num_tiles), sub)     # rebalance -> even tiles
    ragged = (tile_rows * num_tiles != n)

    tile_in_bytes = tile_rows * d * itemsize
    tile_f32_bytes = tile_rows * d * 4
    tiled_limit = int(min(cap * 3 // 4,
                          max(32 * _MIB,
                              4 * tile_in_bytes + 4 * tile_f32_bytes + 4 * _MIB)))

    x_spec = pl.BlockSpec((tile_rows, d), lambda i: (i, 0))   # full-d last block
    cmean_spec = pl.BlockSpec((1, d), lambda i: (0, 0))
    scalar_spec = pl.BlockSpec((1, 1), lambda i: (0, 0))
    o_spec = pl.BlockSpec((tile_rows, d), lambda i: (i, 0))
    out_shape = jax.ShapeDtypeStruct((n, d), x.dtype)

    stats_params = pltpu.CompilerParams(
        dimension_semantics=("arbitrary",), vmem_limit_bytes=tiled_limit)
    apply_params = pltpu.CompilerParams(
        dimension_semantics=("parallel",), vmem_limit_bytes=tiled_limit)

    if mode == 'PN':
        cmean, mult = pl.pallas_call(
            functools.partial(_pn_stats_kernel, n_rows=n, tile_rows=tile_rows,
                              scale=scale, ragged=ragged),
            out_shape=(jax.ShapeDtypeStruct((1, d), jnp.float32),
                       jax.ShapeDtypeStruct((1, 1), jnp.float32)),
            grid_spec=pltpu.PrefetchScalarGridSpec(
                num_scalar_prefetch=0,
                grid=(num_tiles,),
                in_specs=[x_spec],
                out_specs=(cmean_spec, scalar_spec),
                scratch_shapes=[pltpu.VMEM((1, d), jnp.float32)]),
            compiler_params=stats_params,
        )(x)
        out = pl.pallas_call(
            _pn_apply_kernel,
            out_shape=out_shape,
            grid_spec=pltpu.PrefetchScalarGridSpec(
                num_scalar_prefetch=0,
                grid=(num_tiles,),
                in_specs=[cmean_spec, scalar_spec, x_spec],
                out_specs=o_spec),
            compiler_params=apply_params,
        )(cmean, mult, x)
    else:
        cmean = pl.pallas_call(
            functools.partial(_mean_stats_kernel, n_rows=n, tile_rows=tile_rows,
                              ragged=ragged),
            out_shape=jax.ShapeDtypeStruct((1, d), jnp.float32),
            grid_spec=pltpu.PrefetchScalarGridSpec(
                num_scalar_prefetch=0,
                grid=(num_tiles,),
                in_specs=[x_spec],
                out_specs=cmean_spec),
            compiler_params=stats_params,
        )(x)
        kernel = functools.partial(
            _pn_si_apply_kernel if mode == 'PN-SI' else _pn_scs_apply_kernel,
            scale=scale)
        out = pl.pallas_call(
            kernel,
            out_shape=out_shape,
            grid_spec=pltpu.PrefetchScalarGridSpec(
                num_scalar_prefetch=0,
                grid=(num_tiles,),
                in_specs=[cmean_spec, x_spec],
                out_specs=o_spec),
            compiler_params=apply_params,
        )(cmean, x)

    return out


# ---------------------------------------------------------------------------
# pure-JAX reference (mirrors the PyTorch forward)
# ---------------------------------------------------------------------------
def _pair_norm_ref(x, mode='PN', scale=1.0):
    if mode == 'None':
        return x
    col_mean = x.mean(axis=0)
    if mode == 'PN':
        x = x - col_mean
        rownorm_mean = jnp.sqrt(1e-06 + (x ** 2).sum(axis=1).mean())
        x = scale * x / rownorm_mean
    if mode == 'PN-SI':
        x = x - col_mean
        rownorm_individual = jnp.sqrt(1e-06 + (x ** 2).sum(axis=1, keepdims=True))
        x = scale * x / rownorm_individual
    if mode == 'PN-SCS':
        rownorm_individual = jnp.sqrt(1e-06 + (x ** 2).sum(axis=1, keepdims=True))
        x = scale * x / rownorm_individual - col_mean
    return x


if __name__ == "__main__":
    key = jax.random.PRNGKey(0)
    k1, k2, k3 = jax.random.split(key, 3)
    cases = [
        # (x, extra kwargs) -- kwargs only steer which code path is exercised.
        (jax.random.normal(k1, (16, 32), dtype=jnp.float32), {}),        # fused path
        (jax.random.normal(k2, (300, 200), dtype=jnp.float32), {}),      # fused, ragged lanes
        (jax.random.normal(k3, (1000, 200), dtype=jnp.float32),
         dict(_force_tiled=True, _tile_target_bytes=64 * 1024)),         # tiled, ragged tail
    ]

    ok = True
    for x, kw in cases:
        for mode in ['PN', 'PN-SI', 'PN-SCS', 'None']:
            out = jax.block_until_ready(pair_norm(x, mode=mode, scale=1.0, **kw))
            ref = _pair_norm_ref(x, mode=mode, scale=1.0)
            ok &= bool(jnp.allclose(out, ref, atol=1e-4, rtol=1e-4))

    if ok:
        print("KERNEL_OK")
    else:
        print("KERNEL_MISMATCH")
</pallas_src>

<mosaic_0001>
module attributes {stable_mosaic.version = 11 : i64} {
  func.func @_pn_fused_kernel(%arg0: memref<16x32xf32, #tpu.memory_space<vmem>>, %arg1: memref<16x32xf32, #tpu.memory_space<vmem>>) attributes {dimension_semantics = [], scalar_prefetch = 0 : i64, scratch_operands = 0 : i64, tpu.core_type = #tpu.core_type<tc>} {
    %c0 = arith.constant 0 : index
    %c0_0 = arith.constant 0 : index
    %0 = vector.load %arg0[%c0, %c0_0] : memref<16x32xf32, #tpu.memory_space<vmem>>, vector<16x32xf32>
    %cst = arith.constant dense<0.000000e+00> : vector<32xf32>
    %1 = vector.multi_reduction <add>, %0, %cst [0] : vector<16x32xf32> to vector<32xf32>
    %2 = vector.shape_cast %1 : vector<32xf32> to vector<1x32xf32>
    %cst_1 = arith.constant 1.600000e+01 : f32
    %3 = vector.broadcast %cst_1 : f32 to vector<1x32xf32>
    %4 = arith.divf %2, %3 : vector<1x32xf32>
    %5 = vector.broadcast %4 : vector<1x32xf32> to vector<16x32xf32>
    %6 = arith.subf %0, %5 : vector<16x32xf32>
    %7 = arith.mulf %6, %6 : vector<16x32xf32>
    %8 = vector.shape_cast %7 : vector<16x32xf32> to vector<1x16x32xf32>
    %cst_2 = arith.constant dense<0.000000e+00> : vector<1xf32>
    %9 = vector.multi_reduction <add>, %8, %cst_2 [1, 2] : vector<1x16x32xf32> to vector<1xf32>
    %10 = vector.shape_cast %9 : vector<1xf32> to vector<1x1x1xf32>
    %11 = vector.extract %10[0, 0, 0] : f32 from vector<1x1x1xf32>
    %12 = vector.broadcast %11 : f32 to vector<1x1xf32>
    %cst_3 = arith.constant 6.250000e-02 : f32
    %13 = vector.broadcast %cst_3 : f32 to vector<1x1xf32>
    %14 = arith.mulf %12, %13 : vector<1x1xf32>
    %cst_4 = arith.constant 9.99999997E-7 : f32
    %15 = vector.broadcast %cst_4 : f32 to vector<1x1xf32>
    %16 = arith.addf %15, %14 : vector<1x1xf32>
    %17 = math.rsqrt %16 : vector<1x1xf32>
    %cst_5 = arith.constant 1.000000e+00 : f32
    %18 = vector.broadcast %cst_5 : f32 to vector<1x1xf32>
    %19 = arith.mulf %18, %17 : vector<1x1xf32>
    %20 = vector.broadcast %19 : vector<1x1xf32> to vector<16x32xf32>
    %21 = arith.mulf %6, %20 : vector<16x32xf32>
    %c0_6 = arith.constant 0 : index
    %c0_7 = arith.constant 0 : index
    %22 = vector.load %arg1[%c0_6, %c0_7] : memref<16x32xf32, #tpu.memory_space<vmem>>, vector<16x32xf32>
    tpu.vector_store %arg1[%c0_6, %c0_7], %21 {strides = array<i32>} : memref<16x32xf32, #tpu.memory_space<vmem>>, vector<16x32xf32>,
    return
  }
}

</mosaic_0001>

<llo_original>
// kernel: tpu_custom_call.1
$region0: #{tpu_custom_call.1}
  #allocation0 [shape = 'u32[]', space=smem, size = 0x4, offset = 0x4, fixed_abs, tag = 'smem constant byte address 0x4 - core index']
  #allocation1 [shape = 'u32[72,128]{1,0:T(1,128)}', space=vmem, size = 0x9000, scoped, tag = 'internal scratch']
  %s0 = inlined_call_operand.hbm [shape: f32[16,32], index: 0, kind: input, shape index: {}]
  %s1 = inlined_call_operand.hbm [shape: f32[16,32], index: 1, kind: output, shape index: {}]
  %s2 = sld [smem:[#allocation0]]
  $region18: #{tpu_custom_call.1} parent=0
    _
  %s4 = ssub.s32 1, %s2
  %s5 = scalar_select 0, %s4, %s2
  $region1: #{tpu_custom_call.1} parent=0
    #allocation2 [shape = 'u8[8192]{0}', space=vmem, size = 0x2000, scoped, tag = 'input window, operand 0, single buffered']
    #allocation3 [shape = 's32[1]{0}', space=sflag, size = 0x4, scoped, tag = 'scoped memory for tpu_custom_call.1']
    #allocation4 [shape = 's32[1]{0}', space=sflag, size = 0x4, scoped, tag = 'scoped memory for tpu_custom_call.1']
    #allocation5 [shape = 'u8[8192]{0}', space=vmem, size = 0x2000, scoped, tag = 'output window, operand 0, single buffered']
    %6 = vsyncpa [#allocation3], 0
    %7 = vsyncpa [#allocation4], 0
    // Predicated region
    $region2: #{tpu_custom_call.1} parent=1 // pred_check
      _
    $region3: #{tpu_custom_call.1} parent=1 // pred_check_branch
      %9 = sbr.rel (0) target = $region5
    $region4: #{tpu_custom_call.1} parent=1 // pred_region
      %11 = vsyncadd [#allocation3], 0
      %s12 = sshll.u32 %s0, 4
      %s13 = int_to_ptr.hbm [resolvable:$true] %s12
      %s14 = sshll.u32 [#allocation2], 4
      %s15 = int_to_ptr.vmem [resolvable:$true] %s14
      %20 = dma.hbm_to_vmem [thread:$0]  %s13, 256, %s15, [#allocation3], 128, 128, 8
    $region5: #{tpu_custom_call.1} parent=1 // pred_fallthru
      _
    // Predicated region
    $region6: #{tpu_custom_call.1} parent=1 // pred_check
      _
    $region7: #{tpu_custom_call.1} parent=1 // pred_check_branch
      %22 = sbr.rel (0) target = $region9
    $region8: #{tpu_custom_call.1} parent=1 // pred_region
      %24 = dma.done [#allocation3], 256
    $region9: #{tpu_custom_call.1} parent=1 // pred_fallthru
      _
    %v25 = vld [vmem:[#allocation2] sm:$0xff]
    %v26 = vld [vmem:[#allocation2 + $0x8] sm:$0xff]
    %vm27 = vcmask 261120
    %v28 = vsel %vm27, %v25, 0.0
    %v29 = vsel %vm27, %v26, 0.0
    %v30 = vadd.f32 %v28, %v29
    %v31 = vrot.slane %v30, 4
    %v32 = vadd.f32 %v30, %v31
    %v33 = vrot.slane %v32, 2
    %v34 = vadd.f32 %v32, %v33
    %v35 = vrot.slane %v34, 1
    %v36 = vadd.f32 %v34, %v35
    %v37 = vrcp.pop 16.0
    %v38 = vmul.f32 16.0, %v37
    %v39 = vsub.f32 1.0, %v38
    %v40 = vmul.f32 %v37, %v39
    %v41 = vadd.f32 %v37, %v40
    %vm42 = vweird.f32 %v37
    %v43 = vsel %vm42, %v37, %v41
    %v44 = vmul.f32 %v36, %v43
    %v45 = vsub.f32 %v25, %v44
    %v46 = vsub.f32 %v26, %v44
    %v47 = vmul.f32 %v45, %v45
    %v48 = vmul.f32 %v46, %v46
    %v49 = vsel %vm27, %v47, 0.0
    %v50 = vsel %vm27, %v48, 0.0
    %v51 = vadd.f32 %v49, %v50
    %52 = vadd.xlane.f32.xlu0 %v51
    %v53 = vpop.xlane.xlu0 %52
    %v54 = vrot.slane %v53, 4
    %v55 = vadd.f32 %v53, %v54
    %v56 = vrot.slane %v55, 2
    %v57 = vadd.f32 %v55, %v56
    %v58 = vrot.slane %v57, 1
    %v59 = vadd.f32 %v57, %v58
    %s60 = vtos %v59
    %v61 = vstv %s60
    %v62 = vmul.f32 %v61, 0.0625
    %v63 = vadd.f32 %v62, 1e-06
    %v64 = vrsqrt.pop %v63
    %v65 = vmul.f32 %v64, %v63
    %v66 = vmul.f32 %v65, %v64
    %v67 = vmul.f32 0.5, %v66
    %v68 = vsub.f32 1.5, %v67
    %v69 = vmul.f32 %v64, %v68
    %vm70 = vweird.f32 %v63
    %vm71 = vweird.f32 %v64
    %vm72 = vmor %vm70, %vm71
    %v73 = vsel %vm72, %v64, %v69
    %v74 = vmul.f32 %v45, %v73
    %v75 = vmul.f32 %v46, %v73
    %76 = vst.msk [vmem:[#allocation5] sm:$0xff] %vm27, %v74
    %77 = vst.msk [vmem:[#allocation5 + $0x8] sm:$0xff] %vm27, %v75
    // Predicated region
    $region10: #{tpu_custom_call.1} parent=1 // pred_check
      _
    $region11: #{tpu_custom_call.1} parent=1 // pred_check_branch
      %79 = sbr.rel (0) target = $region13
    $region12: #{tpu_custom_call.1} parent=1 // pred_region
      %81 = vsyncadd [#allocation4], 0
      %s82 = sshll.u32 [#allocation5], 4
      %s83 = int_to_ptr.vmem [resolvable:$true] %s82
      %s84 = sshll.u32 %s1, 4
      %s85 = int_to_ptr.hbm [resolvable:$true] %s84
      %90 = dma.vmem_to_hbm [thread:$0]  %s83, 256, %s85, [#allocation4], 128, 128, 8
    $region13: #{tpu_custom_call.1} parent=1 // pred_fallthru
      _
    // Predicated region
    $region14: #{tpu_custom_call.1} parent=1 // pred_check
      _
    $region15: #{tpu_custom_call.1} parent=1 // pred_check_branch
      %92 = sbr.rel (0) target = $region17
    $region16: #{tpu_custom_call.1} parent=1 // pred_region
      %94 = dma.done [#allocation4], 256
    $region17: #{tpu_custom_call.1} parent=1 // pred_fallthru
      _
    %95 = vsyncpa [#allocation3], 1
    %96 = vsyncpa [#allocation4], 1

</llo_original>
